<compile_context>
chip_gen: v7x
topology: tpu7x:2x2x1
jax: 0.10.0
libtpu: 0.0.40
codegen_flags: <defaults>
</compile_context>

<pallas_src>
import jax
import jax.numpy as jnp
from jax.experimental import pallas as pl
from jax.experimental.pallas import tpu as pltpu


def _make_layernorm_kernel(eps: float, inv_n: float):
    def kernel(x_ref, w_ref, b_ref, o_ref):
        # x_ref: (bt, R, Lm)  -- bt batch rows, lane-dense (R, Lm) slab per row
        # w_ref/b_ref: (R, Lm) -- node-gathered affine params (grid-invariant)
        x = x_ref[...]
        xf = x if x.dtype == jnp.float32 else x.astype(jnp.float32)

        # Single traversal for both moments (per batch row).
        red = (1, 2)
        s = jnp.sum(xf, axis=red, keepdims=True)
        ss = jnp.sum(xf * xf, axis=red, keepdims=True)
        mean = s * inv_n
        var = jnp.maximum(ss * inv_n - mean * mean, 0.0)  # biased var (F.layer_norm)
        inv = jax.lax.rsqrt(var + eps)                    # EUP rsqrt (free slot)

        w = w_ref[...]
        b = b_ref[...]
        if w.dtype != jnp.float32:
            w = w.astype(jnp.float32)
        if b.dtype != jnp.float32:
            b = b.astype(jnp.float32)

        # (R, Lm) affine broadcasts against the (bt, R, Lm) rows.
        o_ref[...] = ((xf - mean) * inv * w + b).astype(o_ref.dtype)

    return kernel


def _pick_block_rows(batch: int, row_bytes: int, block_budget_bytes: int) -> int:
    """Largest divisor of `batch` whose x-block fits the byte budget, while
    keeping at least 2 grid steps (megacore sharding) whenever batch >= 2."""
    best = 1
    for bt in range(1, batch + 1):
        if batch % bt:
            continue
        if bt > 1 and bt * row_bytes > block_budget_bytes:
            continue
        if batch >= 2 and (batch // bt) < 2:
            continue
        best = max(best, bt)
    return best


def layer_normalization(x, weight, bias, idx, eps=1e-5):
    """
    Args:
      x:      (B, C, N, T) float32
      weight: (C, num_nodes_total, T) float32
      bias:   (C, num_nodes_total, T) float32
      idx:    (N,) int32 node indices
    Returns:
      (B, C, N, T) float32
    """
    B, C, N, T = x.shape
    L = C * N * T

    # Node gather of the affine params (tiny XLA gather along the node axis;
    # glue, not the hot path: 2*C*N*T elements vs 2*B*C*N*T of x traffic).
    # TODO(synk): for very small B and very large w/b, gather in-kernel via a
    # scalar-prefetched idx to avoid materializing the gathered slabs in HBM.
    w = weight[:, idx, :].reshape(L)
    b = bias[:, idx, :].reshape(L)

    # Lane-dense view of the normalization volume.
    if L % 128 == 0:
        R, Lm = L // 128, 128
    else:
        R, Lm = 1, L                      # fallback: full row on the lane axis
    x3 = x.reshape(B, R, Lm)
    w2 = w.reshape(R, Lm)
    b2 = b.reshape(R, Lm)

    itemsize = jnp.dtype(x.dtype).itemsize
    row_bytes = L * itemsize
    wb_bytes = L * jnp.dtype(w2.dtype).itemsize + L * jnp.dtype(b2.dtype).itemsize
    slack = 2 * 1024 * 1024               # compiler scratch / pipeline headroom
    vmem_cap = 64 * 1024 * 1024           # valid on v5e/v6e (128 MiB) and v7x (64 MiB)

    # x block and out block are each double-buffered -> 4 block copies live.
    block_budget = max(row_bytes, (vmem_cap - wb_bytes - slack) // 4)
    bt = _pick_block_rows(B, row_bytes, block_budget)
    grid = (B // bt,)

    need = 4 * bt * row_bytes + wb_bytes + slack
    vmem_limit = int(min(max(need, 16 * 1024 * 1024), vmem_cap))

    # TODO(synk): if one row slab (L*itemsize bytes) ever exceeds the VMEM
    # budget (e.g. v7x with huge C*N*T), split the flattened axis with a
    # stats-then-normalize two-pass pipeline instead of a full-row block.
    kernel = _make_layernorm_kernel(float(eps), 1.0 / float(L))

    out = pl.pallas_call(
        kernel,
        out_shape=jax.ShapeDtypeStruct((B, R, Lm), x.dtype),
        grid=grid,
        in_specs=[
            pl.BlockSpec((bt, R, Lm), lambda i: (i, 0, 0)),
            pl.BlockSpec((R, Lm), lambda i: (0, 0)),
            pl.BlockSpec((R, Lm), lambda i: (0, 0)),
        ],
        out_specs=pl.BlockSpec((bt, R, Lm), lambda i: (i, 0, 0)),
        compiler_params=pltpu.CompilerParams(
            dimension_semantics=("parallel",),
            vmem_limit_bytes=vmem_limit,
        ),
    )(x3, w2, b2)

    return out.reshape(B, C, N, T)


def layer_normalization_ref(x, weight, bias, idx, eps=1e-5):
    """Pure-JAX reference (mirrors F.layer_norm over dims 1:)."""
    w = weight[:, idx, :]
    b = bias[:, idx, :]
    mean = jnp.mean(x, axis=(1, 2, 3), keepdims=True)
    var = jnp.mean((x - mean) ** 2, axis=(1, 2, 3), keepdims=True)
    xn = (x - mean) / jnp.sqrt(var + eps)
    return xn * w[None] + b[None]


if __name__ == "__main__":
    key = jax.random.PRNGKey(0)
    B, C, N_total, N, T = 2, 4, 20, 16, 8

    kx, kidx, kw, kb = jax.random.split(key, 4)
    x = jax.random.normal(kx, (B, C, N, T), dtype=jnp.float32)
    idx = jax.random.permutation(kidx, N_total)[:N].astype(jnp.int32)

    # Module init is ones/zeros; perturb deterministically so the node gather
    # and affine path are actually exercised by the correctness check.
    weight = 1.0 + 0.1 * jax.random.normal(kw, (C, N_total, T), dtype=jnp.float32)
    bias = 0.1 * jax.random.normal(kb, (C, N_total, T), dtype=jnp.float32)

    out = layer_normalization(x, weight, bias, idx, eps=1e-5)
    out = jax.block_until_ready(out)

    ref = layer_normalization_ref(x, weight, bias, idx, eps=1e-5)
    assert out.shape == (B, C, N, T)
    err = jnp.max(jnp.abs(out - ref))
    assert jnp.allclose(out, ref, atol=1e-4, rtol=1e-5), f"mismatch vs reference (max abs err={err})"

    print("KERNEL_OK")
</pallas_src>

<mosaic_0001>
module attributes {stable_mosaic.version = 11 : i64} {
  func.func @kernel(%arg0: i32, %arg1: memref<1x4x128xf32, #tpu.memory_space<vmem>>, %arg2: memref<4x128xf32, #tpu.memory_space<vmem>>, %arg3: memref<4x128xf32, #tpu.memory_space<vmem>>, %arg4: memref<1x4x128xf32, #tpu.memory_space<vmem>>) attributes {dimension_semantics = [#tpu.dimension_semantics<parallel>], iteration_bounds = array<i64: 2>, scalar_prefetch = 0 : i64, scratch_operands = 0 : i64, tpu.core_type = #tpu.core_type<tc>, window_params = [{transform_indices = @transform_0, window_bounds = array<i64: 1, 4, 128>}, {pipeline_mode = #tpu.pipeline_mode<synchronous>, transform_indices = @transform_1, window_bounds = array<i64: 4, 128>}, {pipeline_mode = #tpu.pipeline_mode<synchronous>, transform_indices = @transform_2, window_bounds = array<i64: 4, 128>}, {transform_indices = @transform_3, window_bounds = array<i64: 1, 4, 128>}]} {
    %c0 = arith.constant 0 : index
    %c0_0 = arith.constant 0 : index
    %c0_1 = arith.constant 0 : index
    %0 = vector.load %arg1[%c0, %c0_0, %c0_1] : memref<1x4x128xf32, #tpu.memory_space<vmem>>, vector<1x4x128xf32>
    %cst = arith.constant dense<0.000000e+00> : vector<1xf32>
    %1 = vector.multi_reduction <add>, %0, %cst [1, 2] : vector<1x4x128xf32> to vector<1xf32>
    %2 = vector.shape_cast %1 : vector<1xf32> to vector<1x1x1xf32>
    %3 = arith.mulf %0, %0 : vector<1x4x128xf32>
    %cst_2 = arith.constant dense<0.000000e+00> : vector<1xf32>
    %4 = vector.multi_reduction <add>, %3, %cst_2 [1, 2] : vector<1x4x128xf32> to vector<1xf32>
    %5 = vector.shape_cast %4 : vector<1xf32> to vector<1x1x1xf32>
    %cst_3 = arith.constant 0.001953125 : f32
    %6 = vector.broadcast %cst_3 : f32 to vector<1x1x1xf32>
    %7 = arith.mulf %2, %6 : vector<1x1x1xf32>
    %cst_4 = arith.constant 0.001953125 : f32
    %8 = vector.broadcast %cst_4 : f32 to vector<1x1x1xf32>
    %9 = arith.mulf %5, %8 : vector<1x1x1xf32>
    %10 = arith.mulf %7, %7 : vector<1x1x1xf32>
    %11 = arith.subf %9, %10 : vector<1x1x1xf32>
    %cst_5 = arith.constant 0.000000e+00 : f32
    %12 = vector.broadcast %cst_5 : f32 to vector<1x1x1xf32>
    %13 = arith.maximumf %11, %12 : vector<1x1x1xf32>
    %cst_6 = arith.constant 9.99999974E-6 : f32
    %14 = vector.broadcast %cst_6 : f32 to vector<1x1x1xf32>
    %15 = arith.addf %13, %14 : vector<1x1x1xf32>
    %16 = math.rsqrt %15 : vector<1x1x1xf32>
    %c0_7 = arith.constant 0 : index
    %c0_8 = arith.constant 0 : index
    %17 = vector.load %arg2[%c0_7, %c0_8] : memref<4x128xf32, #tpu.memory_space<vmem>>, vector<4x128xf32>
    %c0_9 = arith.constant 0 : index
    %c0_10 = arith.constant 0 : index
    %18 = vector.load %arg3[%c0_9, %c0_10] : memref<4x128xf32, #tpu.memory_space<vmem>>, vector<4x128xf32>
    %19 = vector.broadcast %7 : vector<1x1x1xf32> to vector<1x4x128xf32>
    %20 = arith.subf %0, %19 : vector<1x4x128xf32>
    %21 = vector.broadcast %16 : vector<1x1x1xf32> to vector<1x4x128xf32>
    %22 = arith.mulf %20, %21 : vector<1x4x128xf32>
    %23 = vector.shape_cast %17 : vector<4x128xf32> to vector<1x4x128xf32>
    %24 = arith.mulf %22, %23 : vector<1x4x128xf32>
    %25 = vector.shape_cast %18 : vector<4x128xf32> to vector<1x4x128xf32>
    %26 = arith.addf %24, %25 : vector<1x4x128xf32>
    %c0_11 = arith.constant 0 : index
    %c0_12 = arith.constant 0 : index
    %c0_13 = arith.constant 0 : index
    %27 = vector.load %arg4[%c0_11, %c0_12, %c0_13] : memref<1x4x128xf32, #tpu.memory_space<vmem>>, vector<1x4x128xf32>
    tpu.vector_store %arg4[%c0_11, %c0_12, %c0_13], %26 {strides = array<i32>} : memref<1x4x128xf32, #tpu.memory_space<vmem>>, vector<1x4x128xf32>,
    return
  }
  func.func @transform_0(%arg0: i32) -> (i32, i32, i32) {
    %c0_i32 = arith.constant 0 : i32
    %c0_i32_0 = arith.constant 0 : i32
    %c0_i32_1 = arith.constant 0 : i32
    return %arg0, %c0_i32, %c0_i32_0 : i32, i32, i32
  }
  func.func @transform_1(%arg0: i32) -> (i32, i32) {
    %c0_i32 = arith.constant 0 : i32
    %c0_i32_0 = arith.constant 0 : i32
    %c0_i32_1 = arith.constant 0 : i32
    return %c0_i32, %c0_i32_0 : i32, i32
  }
  func.func @transform_2(%arg0: i32) -> (i32, i32) {
    %c0_i32 = arith.constant 0 : i32
    %c0_i32_0 = arith.constant 0 : i32
    %c0_i32_1 = arith.constant 0 : i32
    return %c0_i32, %c0_i32_0 : i32, i32
  }
  func.func @transform_3(%arg0: i32) -> (i32, i32, i32) {
    %c0_i32 = arith.constant 0 : i32
    %c0_i32_0 = arith.constant 0 : i32
    %c0_i32_1 = arith.constant 0 : i32
    return %arg0, %c0_i32, %c0_i32_0 : i32, i32, i32
  }
}

</mosaic_0001>

<llo_original>
// kernel: tpu_custom_call.1
$region0: #{tpu_custom_call.1}
  #allocation0 [shape = 'u32[]', space=smem, size = 0x4, offset = 0x4, fixed_abs, tag = 'smem constant byte address 0x4 - core index']
  #allocation1 [shape = 'u32[144,128]{1,0:T(1,128)}', space=vmem, size = 0x12000, scoped, tag = 'internal scratch']
  %s0 = inlined_call_operand.hbm [shape: f32[2,4,128], index: 0, kind: input, shape index: {}]
  %s1 = inlined_call_operand.hbm [shape: f32[4,128], index: 1, kind: input, shape index: {}]
  %s2 = inlined_call_operand.vmem [shape: f32[4,128], index: 2, kind: input, shape index: {}]
  %s3 = inlined_call_operand.hbm [shape: f32[2,4,128], index: 3, kind: output, shape index: {}]
  %s4 = sld [smem:[#allocation0]]
  $region53: #{tpu_custom_call.1} parent=0
    _
  %s6 = ssub.s32 1, %s4
  %s7 = scalar_select 0, %s6, %s4
  $region1: #{tpu_custom_call.1} parent=0
    #allocation2 [shape = 'u8[4096]{0}', space=vmem, size = 0x1000, scoped, tag = 'input window, operand 0']
    #allocation3 [shape = 's32[2]{0}', space=sflag, size = 0x8, scoped, tag = 'scoped memory for tpu_custom_call.1']
    #allocation4 [shape = 's32[2]{0}', space=sflag, size = 0x8, scoped, tag = 'scoped memory for tpu_custom_call.1']
    #allocation5 [shape = 'u8[2048]{0}', space=vmem, size = 0x800, scoped, tag = 'input window, operand 1, single buffered']
    #allocation6 [shape = 's32[1]{0}', space=sflag, size = 0x4, scoped, tag = 'scoped memory for tpu_custom_call.1']
    #allocation7 [shape = 'u8[4096]{0}', space=vmem, size = 0x1000, scoped, tag = 'output window, operand 0']
    %8 = vsyncpa [#allocation3], 0
    %s9 = scalar_lea.sflag [#allocation3], 1
    %10 = vsyncpa %s9, 0
    %11 = vsyncpa [#allocation6], 0
    %12 = vsyncpa [#allocation4], 0
    %s13 = scalar_lea.sflag [#allocation4], 1
    %14 = vsyncpa %s13, 0
    loop: start=0, step=1, limit=4
    $region2: #{tpu_custom_call.1} parent=1 // loop_pre_header
      _
    $region3: #{tpu_custom_call.1} parent=1 // loop_header
      %s16 = sphi 0, %s20
      %p17 = scmp.ge.s32.totalorder %s16, 4
      %s26 = sphi 0, %s28
      %s29 = sphi 0, %s26
      %s30 = sphi 0, %s29
      %s46 = sphi 0, %s30
      %s50 = sphi 0, %s50
      %s52 = sphi 0, %s50
      %s53 = sphi 0, %s52
      %s67 = sphi 0, %s53
      %s71 = sphi 0, %s71
      %s73 = sphi 0, %s71
      %s74 = sphi 0, %s73
      %s88 = sphi 0, %s74
      %s94 = sphi 0, %s96
      %s97 = sphi 0, %s94
      %s98 = sphi 0, %s97
      %s114 = sphi 0, %s98
    $region4: #{tpu_custom_call.1} parent=1 // loop_header_branch
      %19 = sbr.rel (%p17) target = $region8
    $region5: #{tpu_custom_call.1} parent=1 // loop_body
      %s21 = ssub.s32 %s16, 1
      %s22 = ssub.s32 %s16, 2
      %s23 = sadd.s32 %s16, 1
      %s24 = ssub.s32 %s16, %s23
      %p25 = scmp.eq.s32.totalorder %s24, 0
      %s27 = sadd.s32 %s26, 1
      %s28 = scalar_select %p25, %s26, %s27
      %p31 = pneg %p25
      %p32 = scmp.eq.s32.totalorder %s16, 1
      %p33 = por %p31, %p32
      %p34 = scmp.ne.s32.totalorder %s26, %s29
      %p35 = scmp.eq.s32.totalorder %s16, 0
      %p36 = por %p34, %p35
      %p37 = scmp.ne.s32.totalorder %s26, %s29
      %p38 = scmp.eq.s32.totalorder %s21, 1
      %p39 = por %p37, %p38
      %p40 = scmp.ne.s32.totalorder %s29, %s30
      %p41 = scmp.eq.s32.totalorder %s21, 0
      %p42 = por %p40, %p41
      %p43 = scmp.ne.s32.totalorder %s29, %s30
      %p44 = scmp.eq.s32.totalorder %s22, 1
      %p45 = por %p43, %p44
      %p47 = scmp.ne.s32.totalorder %s30, %s46
      %p48 = scmp.eq.s32.totalorder %s22, 0
      %p49 = por %p47, %p48
      %s51 = sadd.s32 %s50, 1
      %p54 = scmp.eq.s32.totalorder %s16, 1
      %p55 = scmp.ne.s32.totalorder %s50, %s52
      %p56 = scmp.eq.s32.totalorder %s16, 0
      %p57 = por %p55, %p56
      %p58 = scmp.ne.s32.totalorder %s50, %s52
      %p59 = scmp.eq.s32.totalorder %s21, 1
      %p60 = por %p58, %p59
      %p61 = scmp.ne.s32.totalorder %s52, %s53
      %p62 = scmp.eq.s32.totalorder %s21, 0
      %p63 = por %p61, %p62
      %p64 = scmp.ne.s32.totalorder %s52, %s53
      %p65 = scmp.eq.s32.totalorder %s22, 1
      %p66 = por %p64, %p65
      %p68 = scmp.ne.s32.totalorder %s53, %s67
      %p69 = scmp.eq.s32.totalorder %s22, 0
      %p70 = por %p68, %p69
      %s72 = sadd.s32 %s71, 1
      %p75 = scmp.eq.s32.totalorder %s16, 1
      %p76 = scmp.ne.s32.totalorder %s71, %s73
      %p77 = scmp.eq.s32.totalorder %s16, 0
      %p78 = por %p76, %p77
      %p79 = scmp.ne.s32.totalorder %s71, %s73
      %p80 = scmp.eq.s32.totalorder %s21, 1
      %p81 = por %p79, %p80
      %p82 = scmp.ne.s32.totalorder %s73, %s74
      %p83 = scmp.eq.s32.totalorder %s21, 0
      %p84 = por %p82, %p83
      %p85 = scmp.ne.s32.totalorder %s73, %s74
      %p86 = scmp.eq.s32.totalorder %s22, 1
      %p87 = por %p85, %p86
      %p89 = scmp.ne.s32.totalorder %s74, %s88
      %p90 = scmp.eq.s32.totalorder %s22, 0
      %p91 = por %p89, %p90
      %s92 = ssub.s32 %s16, %s23
      %p93 = scmp.eq.s32.totalorder %s92, 0
      %s95 = sadd.s32 %s94, 1
      %s96 = scalar_select %p93, %s94, %s95
      %p99 = pneg %p93
      %p100 = scmp.eq.s32.totalorder %s16, 1
      %p101 = por %p99, %p100
      %p102 = scmp.ne.s32.totalorder %s94, %s97
      %p103 = scmp.eq.s32.totalorder %s16, 0
      %p104 = por %p102, %p103
      %p105 = scmp.ne.s32.totalorder %s94, %s97
      %p106 = scmp.eq.s32.totalorder %s21, 1
      %p107 = por %p105, %p106
      %p108 = scmp.ne.s32.totalorder %s97, %s98
      %p109 = scmp.eq.s32.totalorder %s21, 0
      %p110 = por %p108, %p109
      %p111 = scmp.ne.s32.totalorder %s97, %s98
      %p112 = scmp.eq.s32.totalorder %s22, 1
      %p113 = por %p111, %p112
      %p115 = scmp.ne.s32.totalorder %s98, %s114
      %p116 = scmp.eq.s32.totalorder %s22, 0
      %p117 = por %p115, %p116
      %p118 = scmp.le.s32.totalorder 1, %s16
      %p119 = scmp.lt.s32.totalorder %s16, 3
      %p120 = pnand %p118, %p119
      %p121 = pneg %p120
      // Predicated region
      $region9: #{tpu_custom_call.1} parent=5 // pred_check
        _
      $region10: #{tpu_custom_call.1} parent=5 // pred_check_branch
        %123 = sbr.rel (%p120) target = $region12
      $region11: #{tpu_custom_call.1} parent=5 // pred_region
        %s124 = ssub.s32 %s16, 1
        // Predicated region
        $region13: #{tpu_custom_call.1} parent=11 // pred_check
          %p125 = pneg %p63
        $region14: #{tpu_custom_call.1} parent=11 // pred_check_branch
          %127 = sbr.rel (%p125) target = $region16
        $region15: #{tpu_custom_call.1} parent=11 // pred_region
          %s129 = ssub.s32 64, 64
          %130 = vsyncadd [#allocation6], %s129
          %s132 = sshll.u32 [#allocation5], 4
          %s133 = int_to_ptr.vmem [resolvable:$true] %s132
          %135 = dma.hbm_to_vmem [thread:$0]  %s1, 64, %s133, [#allocation6]
        $region16: #{tpu_custom_call.1} parent=11 // pred_fallthru
          _
        // Predicated region
        $region17: #{tpu_custom_call.1} parent=11 // pred_check
          %p136 = pneg %p84
        $region18: #{tpu_custom_call.1} parent=11 // pred_check_branch
          %138 = sbr.rel (%p136) target = $region20
        $region19: #{tpu_custom_call.1} parent=11 // pred_region
          _
        $region20: #{tpu_custom_call.1} parent=11 // pred_fallthru
          _
      $region12: #{tpu_custom_call.1} parent=5 // pred_fallthru
        _
      %p139 = scmp.lt.s32.totalorder %s16, 2
      // Predicated region
      $region21: #{tpu_custom_call.1} parent=5 // pred_check
        %p140 = pneg %p139
      $region22: #{tpu_custom_call.1} parent=5 // pred_check_branch
        %142 = sbr.rel (%p140) target = $region24
      $region23: #{tpu_custom_call.1} parent=5 // pred_region
        // Predicated region
        $region25: #{tpu_custom_call.1} parent=23 // pred_check
          %p143 = pneg %p36
        $region26: #{tpu_custom_call.1} parent=23 // pred_check_branch
          %145 = sbr.rel (%p143) target = $region28
        $region27: #{tpu_custom_call.1} parent=23 // pred_region
          %s146 = sand.u32 %s26, 1
          %s147 = scalar_lea.sflag [#allocation3], %s146
          %s148 = sand.u32 %s26, 1
          %s149 = smul.addr %s148, 4
          %s150 = scalar_lea.vmem [#allocation2], %s149
          %s152 = ssub.s32 64, 64
          %153 = vsyncadd %s147, %s152
          %s154 = smul.addr %s16, 64
          %s155 = scalar_lea.hbm %s0, %s154
          %s157 = sshll.u32 %s150, 4
          %s158 = int_to_ptr.vmem [resolvable:$true] %s157
          %160 = dma.hbm_to_vmem [thread:$0]  %s155, 64, %s158, %s147
        $region28: #{tpu_custom_call.1} parent=23 // pred_fallthru
          _
      $region24: #{tpu_custom_call.1} parent=5 // pred_fallthru
        _
      %p161 = scmp.le.s32.totalorder 1, %s16
      %p162 = scmp.lt.s32.totalorder %s16, 3
      %p163 = pnand %p161, %p162
      %p164 = pneg %p163
      // Predicated region
      $region29: #{tpu_custom_call.1} parent=5 // pred_check
        _
      $region30: #{tpu_custom_call.1} parent=5 // pred_check_branch
        %166 = sbr.rel (%p163) target = $region32
      $region31: #{tpu_custom_call.1} parent=5 // pred_region
        %s167 = ssub.s32 %s16, 1
        %s168 = sand.u32 %s29, 1
        %s169 = scalar_lea.sflag [#allocation3], %s168
        %s170 = sand.u32 %s29, 1
        %s171 = smul.addr %s170, 4
        %s172 = scalar_lea.vmem [#allocation2], %s171
        // Predicated region
        $region33: #{tpu_custom_call.1} parent=31 // pred_check
          %p173 = pneg %p42
        $region34: #{tpu_custom_call.1} parent=31 // pred_check_branch
          %175 = sbr.rel (%p173) target = $region36
        $region35: #{tpu_custom_call.1} parent=31 // pred_region
          %176 = dma.done %s169, 64
        $region36: #{tpu_custom_call.1} parent=31 // pred_fallthru
          _
        // Predicated region
        $region37: #{tpu_custom_call.1} parent=31 // pred_check
          %p177 = pneg %p63
        $region38: #{tpu_custom_call.1} parent=31 // pred_check_branch
          %179 = sbr.rel (%p177) target = $region40
        $region39: #{tpu_custom_call.1} parent=31 // pred_region
          %180 = dma.done [#allocation6], 64
        $region40: #{tpu_custom_call.1} parent=31 // pred_fallthru
          _
        %s181 = sand.u32 %s29, 1
        %s182 = scalar_lea.sflag [#allocation3], %s181
        %s183 = sand.u32 %s29, 1
        %s184 = smul.addr %s183, 4
        %s185 = scalar_lea.vmem [#allocation2], %s184
        %p186 = pneg %p42
        %p187 = pneg %p39
        %p188 = pneg %p63
        %p189 = pneg %p60
        %p190 = pneg %p84
        %p191 = pneg %p81
        %p192 = pneg %p110
        %p193 = pneg %p107
        %s194 = sand.u32 %s97, 1
        %s195 = scalar_lea.sflag [#allocation4], %s194
        %s196 = sand.u32 %s97, 1
        %s197 = smul.addr %s196, 4
        %s198 = scalar_lea.vmem [#allocation7], %s197
        %v199 = vld [vmem:[%s172] sm:$0xf]
        %vm200 = vcmask 1043456
        %v201 = vsel %vm200, %v199, 0.0
        %202 = vadd.xlane.f32.xlu0 %v201
        %v203 = vpop.xlane.xlu0 %202
        %v204 = vrot.slane %v203, 4
        %v205 = vadd.f32 %v203, %v204
        %v206 = vrot.slane %v205, 2
        %v207 = vadd.f32 %v205, %v206
        %v208 = vrot.slane %v207, 1
        %v209 = vadd.f32 %v207, %v208
        %v210 = vmul.f32 %v199, %v199
        %v211 = vsel %vm200, %v210, 0.0
        %212 = vadd.xlane.f32.xlu0 %v211
        %v213 = vpop.xlane.xlu0 %212
        %v214 = vrot.slane %v213, 4
        %v215 = vadd.f32 %v213, %v214
        %v216 = vrot.slane %v215, 2
        %v217 = vadd.f32 %v215, %v216
        %v218 = vrot.slane %v217, 1
        %v219 = vadd.f32 %v217, %v218
        %v220 = vmul.f32 %v209, 0.001953125
        %v221 = vmul.f32 %v219, 0.001953125
        %v222 = vmul.f32 %v220, %v220
        %v223 = vsub.f32 %v221, %v222
        %v224 = vmax.f32 %v223, 0.0
        %v225 = vadd.f32 %v224, 1e-05
        %v226 = vrsqrt.pop %v225
        %v227 = vld [vmem:[#allocation5] sm:$0xf]
        %v228 = vld [vmem:[%s2] sm:$0xf]
        %v229 = vsub.f32 %v199, %v220
        %v230 = vmul.f32 %v229, %v226
        %v231 = vmul.f32 %v230, %v227
        %v232 = vadd.f32 %v231, %v228
        %233 = vst [vmem:[%s198] sm:$0xf] %v232
        %s234 = sand.u32 %s97, 1
        %s235 = scalar_lea.sflag [#allocation4], %s234
        %s236 = sand.u32 %s97, 1
        %s237 = smul.addr %s236, 4
        %s238 = scalar_lea.vmem [#allocation7], %s237
        // Predicated region
        $region41: #{tpu_custom_call.1} parent=31 // pred_check
          %p239 = pneg %p107
        $region42: #{tpu_custom_call.1} parent=31 // pred_check_branch
          %241 = sbr.rel (%p239) target = $region44
        $region43: #{tpu_custom_call.1} parent=31 // pred_region
          %s243 = ssub.s32 64, 64
          %244 = vsyncadd %s235, %s243
          %s245 = smul.addr %s21, 64
          %s246 = scalar_lea.hbm %s3, %s245
          %s248 = sshll.u32 %s238, 4
          %s249 = int_to_ptr.vmem [resolvable:$true] %s248
          %251 = dma.vmem_to_hbm [thread:$0]  %s249, 64, %s246, %s235
        $region44: #{tpu_custom_call.1} parent=31 // pred_fallthru
          _
      $region32: #{tpu_custom_call.1} parent=5 // pred_fallthru
        _
      %p252 = scmp.le.s32.totalorder 2, %s16
      // Predicated region
      $region45: #{tpu_custom_call.1} parent=5 // pred_check
        %p253 = pneg %p252
      $region46: #{tpu_custom_call.1} parent=5 // pred_check_branch
        %255 = sbr.rel (%p253) target = $region48
      $region47: #{tpu_custom_call.1} parent=5 // pred_region
        %s256 = ssub.s32 %s16, 2
        // Predicated region
        $region49: #{tpu_custom_call.1} parent=47 // pred_check
          %p257 = pneg %p113
        $region50: #{tpu_custom_call.1} parent=47 // pred_check_branch
          %259 = sbr.rel (%p257) target = $region52
        $region51: #{tpu_custom_call.1} parent=47 // pred_region
          %s260 = sand.u32 %s98, 1
          %s261 = scalar_lea.sflag [#allocation4], %s260
          %s262 = sand.u32 %s98, 1
          %s263 = smul.addr %s262, 4
          %s264 = scalar_lea.vmem [#allocation7], %s263
          %265 = dma.done %s261, 64
        $region52: #{tpu_custom_call.1} parent=47 // pred_fallthru
          _
      $region48: #{tpu_custom_call.1} parent=5 // pred_fallthru
        _
    $region6: #{tpu_custom_call.1} parent=1 // loop_footer
      %s20 = sadd.s32 1, %s16
    $region7: #{tpu_custom_call.1} parent=1 // loop_footer_branch
      %15 = sbr.rel target = $region3
    $region8: #{tpu_custom_call.1} parent=1 // loop_exit
      _
    %266 = vsyncpa [#allocation3], 1
    %s267 = scalar_lea.sflag [#allocation3], 1
    %268 = vsyncpa %s267, 1
    %269 = vsyncpa [#allocation6], 1
    %270 = vsyncpa [#allocation4], 1
    %s271 = scalar_lea.sflag [#allocation4], 1
    %272 = vsyncpa %s271, 1

</llo_original>
